<compile_context>
chip_gen: v5e
topology: v5e:2x2
jax: 0.10.0
libtpu: 0.0.40
codegen_flags: <defaults>
</compile_context>

<pallas_src>
import functools

import numpy as np
import jax
import jax.numpy as jnp
from jax.experimental import pallas as pl
from jax.experimental.pallas import tpu as pltpu


# ---------------------------------------------------------------------------
# Fused kernel: Linear(+tanh) -> up1(+tanh) -> up2(+tanh) -> up3.
#
# Layout: activations are (pixels, channels); pixel p = (i*g + j)*B + b on the
# sublane axis, channels on the lane axis.  Every layer is one MXU matmul
# against an offline-prepared weight.
#
#   xk  = (s1 @ x @ s2) * m        # kron(I_gg, x): (gg*B, gg*L)
#   a1  = tanh(xk @ wlin_big)      # (gg*B, 16)   cols c
#   y1  = tanh(a1 @ w1)            # (gg*B, 32)   cols k1*8  + oc
#   y2  = tanh(y1 @ w2_bd)         # (gg*B, 64)   cols k1*16 + k2*4 + oc
#   out =      y2 @ w3_bd          # (gg*B, 128)  cols k1*32 + k2*8 + k3*2 + oc
#
# with k = a*2 + b the 2x2 transposed-conv kernel offset of each layer.
# s1/s2/m are tiny shape-only constants; w2_bd/w3_bd are I_4 (x) W2, I_16 (x) W3.
# ---------------------------------------------------------------------------
def _decoder2d_kernel(x_ref, s1_ref, s2_ref, m_ref,
                      wlin_ref, w1_ref, w2_ref, w3_ref, o_ref):
    f32 = jnp.float32
    # kron(I_gg, x): tile x over pixel rows (s1) and latent cols (s2) with two
    # constant matmuls, then mask off-diagonal blocks.  MXU/VPU only.
    rep = jnp.dot(jnp.dot(s1_ref[...], x_ref[...], preferred_element_type=f32),
                  s2_ref[...], preferred_element_type=f32)
    xk = rep * m_ref[...]
    a1 = jnp.tanh(jnp.dot(xk, wlin_ref[...], preferred_element_type=f32))
    y1 = jnp.tanh(jnp.dot(a1, w1_ref[...], preferred_element_type=f32))
    y2 = jnp.tanh(jnp.dot(y1, w2_ref[...], preferred_element_type=f32))
    o_ref[...] = jnp.dot(y2, w3_ref[...], preferred_element_type=f32)


def _decoder2d_pallas(x, s1, s2, m, wlin_big, w1, w2_bd, w3_bd):
    P = s1.shape[0]                 # g*g*B pixels
    B, L = s1.shape[1], s2.shape[0]
    ggL = s2.shape[1]
    flops = 2 * P * (B * L + L * ggL + ggL * 16 + 16 * 32 + 32 * 64 + 64 * 128)
    byts = 4 * (x.size + s1.size + s2.size + m.size + wlin_big.size
                + w1.size + w2_bd.size + w3_bd.size + P * 128)
    vmem = pl.BlockSpec(memory_space=pltpu.MemorySpace.VMEM)
    # Single block (no grid): total live data is tiny; the kernel is
    # dispatch/latency bound, which is exactly why everything is fused here.
    return pl.pallas_call(
        _decoder2d_kernel,
        out_shape=jax.ShapeDtypeStruct((P, 128), jnp.float32),
        in_specs=[vmem] * 8,
        out_specs=vmem,
        cost_estimate=pl.CostEstimate(
            flops=flops, transcendentals=112 * P, bytes_accessed=byts),
    )(x, s1, s2, m, wlin_big, w1, w2_bd, w3_bd)


# ---------------------------------------------------------------------------
# Parameters (deterministic synthetic init, PyTorch layouts) + one-time
# re-layout into the exact operands the kernel consumes.
# ---------------------------------------------------------------------------
def init_decoder2d_params(key, latent_dimension, out_grid_size):
    inner = out_grid_size // 8  # int(out_grid_size * 2**-3)
    k0, k1, k2, k3 = jax.random.split(key, 4)
    scale = 0.1
    params = {
        # nn.Linear(latent, 16*inner*inner, bias=False).weight: (out, in)
        "linear_w": scale * jax.random.normal(
            k0, (16 * inner * inner, latent_dimension), jnp.float32),
        # nn.ConvTranspose2d weights: (in_ch, out_ch, 2, 2)
        "up1_w": scale * jax.random.normal(k1, (16, 8, 2, 2), jnp.float32),
        "up2_w": scale * jax.random.normal(k2, (8, 4, 2, 2), jnp.float32),
        "up3_w": scale * jax.random.normal(k3, (4, 2, 2, 2), jnp.float32),
    }
    return params, inner


def _kmajor_deconv_weight(w):
    """(Cin, Cout, 2, 2) -> (Cin, 4*Cout), cols ordered (a*2+b)*Cout + oc."""
    cin, cout = w.shape[0], w.shape[1]
    return jnp.transpose(w, (0, 2, 3, 1)).reshape(cin, 4 * cout)


def prepare_decoder2d_params(params):
    """One-time weight re-layout, outside the jitted hot path."""
    wlin = params["linear_w"]                        # (16*g*g, latent)
    gg = wlin.shape[0] // 16
    L = wlin.shape[1]
    # Linear weight with rows ordered (q, l), q = i*g + j, so that
    # kron(I_gg, x) @ wlin_big yields the (pixels, 16) activation directly.
    wlin_big = jnp.transpose(wlin.reshape(16, gg, L), (1, 2, 0)).reshape(gg * L, 16)
    w1 = _kmajor_deconv_weight(params["up1_w"])      # (16, 32)
    w2 = _kmajor_deconv_weight(params["up2_w"])      # (8, 16)
    w3 = _kmajor_deconv_weight(params["up3_w"])      # (4, 8)
    return {
        "wlin_big": wlin_big,                        # (g*g*L, 16)
        "w1": w1,                                    # (16, 32)
        "w2_bd": jnp.kron(jnp.eye(4, dtype=w2.dtype), w2),    # (32, 64)
        "w3_bd": jnp.kron(jnp.eye(16, dtype=w3.dtype), w3),   # (64, 128)
    }


# ---------------------------------------------------------------------------
# Forward pass:  x (B, latent) -> (B, 2, 8g, 8g) NCHW, matching PyTorch.
# ---------------------------------------------------------------------------
def decoder2d_forward(prepared, x, inner_grid_size):
    B = x.shape[0]
    g = inner_grid_size
    gg = g * g
    L = prepared["wlin_big"].shape[0] // gg

    # Shape-only constants, built with numpy at trace time (baked into the
    # jitted program):  (s1 @ x @ s2) * m == kron(I_gg, x).
    s1 = jnp.asarray(np.tile(np.eye(B, dtype=np.float32), (gg, 1)))   # (gg*B, B)
    s2 = jnp.asarray(np.tile(np.eye(L, dtype=np.float32), (1, gg)))   # (L, gg*L)
    m = jnp.asarray(np.kron(np.eye(gg, dtype=np.float32),
                            np.ones((B, L), dtype=np.float32)))       # (gg*B, gg*L)

    y3 = _decoder2d_pallas(x, s1, s2, m, prepared["wlin_big"],
                           prepared["w1"], prepared["w2_bd"], prepared["w3_bd"])

    # Single depth-to-space to NCHW, once, outside the kernel (accepted per
    # review — it is a bit-interleave of sublane/lane factors):
    #   y3[(i*g+j)*B + b, a1*64+b1*32+a2*16+b2*8+a3*4+b3*2+oc]
    #     -> out[b, oc, 8i+4a1+2a2+a3, 8j+4b1+2b2+b3]
    y = y3.reshape(g, g, B, 2, 2, 2, 2, 2, 2, 2)
    #              i  j  b a1 b1 a2 b2 a3 b3 oc
    y = jnp.transpose(y, (2, 9, 0, 3, 5, 7, 1, 4, 6, 8))
    #   -> (b, oc, i, a1, a2, a3, j, b1, b2, b3)
    return y.reshape(B, 2, 8 * g, 8 * g)


# ---------------------------------------------------------------------------
# Pure-JAX reference (mirrors the PyTorch module exactly) for correctness.
# ---------------------------------------------------------------------------
def _ref_deconv2x2(x, w, apply_tanh):
    B, Cin, H, W = x.shape
    Cout = w.shape[1]
    x2d = jnp.transpose(x, (0, 2, 3, 1)).reshape(B * H * W, Cin)
    y2d = x2d @ w.reshape(Cin, Cout * 4)
    if apply_tanh:
        y2d = jnp.tanh(y2d)
    y = y2d.reshape(B, H, W, Cout, 2, 2)
    return jnp.transpose(y, (0, 3, 1, 4, 2, 5)).reshape(B, Cout, 2 * H, 2 * W)


def _ref_forward(params, x, inner):
    B = x.shape[0]
    h = jnp.tanh(x @ params["linear_w"].T).reshape(B, 16, inner, inner)
    h = _ref_deconv2x2(h, params["up1_w"], True)
    h = _ref_deconv2x2(h, params["up2_w"], True)
    h = _ref_deconv2x2(h, params["up3_w"], False)
    return h


def _run_config(latent_dimension, out_grid_size, batch):
    key = jax.random.PRNGKey(0)
    kp, kx = jax.random.split(key)
    params, inner = init_decoder2d_params(kp, latent_dimension, out_grid_size)
    prepared = prepare_decoder2d_params(params)     # one-time weight re-layout
    x = jax.random.normal(kx, (batch, latent_dimension), jnp.float32)

    fwd = jax.jit(functools.partial(decoder2d_forward, inner_grid_size=inner))
    out = jax.block_until_ready(fwd(prepared, x))
    assert out.shape == (batch, 2, out_grid_size, out_grid_size), out.shape

    ref = _ref_forward(params, x, inner)
    err = float(jnp.max(jnp.abs(out - ref)))
    assert jnp.allclose(out, ref, atol=1e-5, rtol=1e-4), ("mismatch", err)


if __name__ == "__main__":
    # Config 1: nominal small size (latent=8, 32x32 output -> g=4, batch=2).
    _run_config(latent_dimension=8, out_grid_size=32, batch=2)
    # Config 2: different (latent, g, B) to guard the shape-generic algebra.
    _run_config(latent_dimension=4, out_grid_size=16, batch=4)
    print("KERNEL_OK")
</pallas_src>

<mosaic_0001>
module attributes {stable_mosaic.version = 11 : i64} {
  func.func @_decoder2d_kernel(%arg0: memref<2x8xf32, #tpu.memory_space<vmem>>, %arg1: memref<32x2xf32, #tpu.memory_space<vmem>>, %arg2: memref<8x128xf32, #tpu.memory_space<vmem>>, %arg3: memref<32x128xf32, #tpu.memory_space<vmem>>, %arg4: memref<128x16xf32, #tpu.memory_space<vmem>>, %arg5: memref<16x32xf32, #tpu.memory_space<vmem>>, %arg6: memref<32x64xf32, #tpu.memory_space<vmem>>, %arg7: memref<64x128xf32, #tpu.memory_space<vmem>>, %arg8: memref<32x128xf32, #tpu.memory_space<vmem>>) attributes {dimension_semantics = [], scalar_prefetch = 0 : i64, scratch_operands = 0 : i64, tpu.core_type = #tpu.core_type<tc>} {
    %c0 = arith.constant 0 : index
    %c0_0 = arith.constant 0 : index
    %0 = vector.load %arg1[%c0, %c0_0] : memref<32x2xf32, #tpu.memory_space<vmem>>, vector<32x2xf32>
    %c0_1 = arith.constant 0 : index
    %c0_2 = arith.constant 0 : index
    %1 = vector.load %arg0[%c0_1, %c0_2] : memref<2x8xf32, #tpu.memory_space<vmem>>, vector<2x8xf32>
    %cst = arith.constant dense<0.000000e+00> : vector<32x8xf32>
    %2 = tpu.matmul %0, %1, %cst {dimension_numbers = #tpu.dot_dimension_numbers<[1], [0], [0], [1], [0, 0, 1, 1], [], []>} : vector<32x2xf32>, vector<2x8xf32>, vector<32x8xf32> -> vector<32x8xf32>
    %c0_3 = arith.constant 0 : index
    %c0_4 = arith.constant 0 : index
    %3 = vector.load %arg2[%c0_3, %c0_4] : memref<8x128xf32, #tpu.memory_space<vmem>>, vector<8x128xf32>
    %cst_5 = arith.constant dense<0.000000e+00> : vector<32x128xf32>
    %4 = tpu.matmul %2, %3, %cst_5 {dimension_numbers = #tpu.dot_dimension_numbers<[1], [0], [0], [1], [0, 0, 1, 1], [], []>} : vector<32x8xf32>, vector<8x128xf32>, vector<32x128xf32> -> vector<32x128xf32>
    %c0_6 = arith.constant 0 : index
    %c0_7 = arith.constant 0 : index
    %5 = vector.load %arg3[%c0_6, %c0_7] : memref<32x128xf32, #tpu.memory_space<vmem>>, vector<32x128xf32>
    %6 = arith.mulf %4, %5 : vector<32x128xf32>
    %c0_8 = arith.constant 0 : index
    %c0_9 = arith.constant 0 : index
    %7 = vector.load %arg4[%c0_8, %c0_9] : memref<128x16xf32, #tpu.memory_space<vmem>>, vector<128x16xf32>
    %cst_10 = arith.constant dense<0.000000e+00> : vector<32x16xf32>
    %8 = tpu.matmul %6, %7, %cst_10 {dimension_numbers = #tpu.dot_dimension_numbers<[1], [0], [0], [1], [0, 0, 1, 1], [], []>} : vector<32x128xf32>, vector<128x16xf32>, vector<32x16xf32> -> vector<32x16xf32>
    %9 = math.tanh %8 : vector<32x16xf32>
    %c0_11 = arith.constant 0 : index
    %c0_12 = arith.constant 0 : index
    %10 = vector.load %arg5[%c0_11, %c0_12] : memref<16x32xf32, #tpu.memory_space<vmem>>, vector<16x32xf32>
    %cst_13 = arith.constant dense<0.000000e+00> : vector<32x32xf32>
    %11 = tpu.matmul %9, %10, %cst_13 {dimension_numbers = #tpu.dot_dimension_numbers<[1], [0], [0], [1], [0, 0, 1, 1], [], []>} : vector<32x16xf32>, vector<16x32xf32>, vector<32x32xf32> -> vector<32x32xf32>
    %12 = math.tanh %11 : vector<32x32xf32>
    %c0_14 = arith.constant 0 : index
    %c0_15 = arith.constant 0 : index
    %13 = vector.load %arg6[%c0_14, %c0_15] : memref<32x64xf32, #tpu.memory_space<vmem>>, vector<32x64xf32>
    %cst_16 = arith.constant dense<0.000000e+00> : vector<32x64xf32>
    %14 = tpu.matmul %12, %13, %cst_16 {dimension_numbers = #tpu.dot_dimension_numbers<[1], [0], [0], [1], [0, 0, 1, 1], [], []>} : vector<32x32xf32>, vector<32x64xf32>, vector<32x64xf32> -> vector<32x64xf32>
    %15 = math.tanh %14 : vector<32x64xf32>
    %c0_17 = arith.constant 0 : index
    %c0_18 = arith.constant 0 : index
    %16 = vector.load %arg7[%c0_17, %c0_18] : memref<64x128xf32, #tpu.memory_space<vmem>>, vector<64x128xf32>
    %cst_19 = arith.constant dense<0.000000e+00> : vector<32x128xf32>
    %17 = tpu.matmul %15, %16, %cst_19 {dimension_numbers = #tpu.dot_dimension_numbers<[1], [0], [0], [1], [0, 0, 1, 1], [], []>} : vector<32x64xf32>, vector<64x128xf32>, vector<32x128xf32> -> vector<32x128xf32>
    %c0_20 = arith.constant 0 : index
    %c0_21 = arith.constant 0 : index
    %18 = vector.load %arg8[%c0_20, %c0_21] : memref<32x128xf32, #tpu.memory_space<vmem>>, vector<32x128xf32>
    tpu.vector_store %arg8[%c0_20, %c0_21], %17 {strides = array<i32>} : memref<32x128xf32, #tpu.memory_space<vmem>>, vector<32x128xf32>,
    return
  }
}

</mosaic_0001>

<llo_original>
// kernel: decoder2d_forward.1
$region0: #{decoder2d_forward.1}
  #allocation0 [shape = 'u32[]', space=smem, size = 0x4, offset = 0x4, fixed_abs, tag = 'smem constant byte address 0x4 - core index']
  #allocation1 [shape = 'u32[72,128]{1,0:T(1,128)}', space=vmem, size = 0x9000, scoped, tag = 'internal scratch']
  %s0 = inlined_call_operand.vmem [shape: f32[2,8], index: 0, kind: input, shape index: {}]
  %s1 = inlined_call_operand.hbm [shape: f32[32,2], index: 1, kind: input, shape index: {}]
  %s2 = inlined_call_operand.hbm [shape: f32[8,128], index: 2, kind: input, shape index: {}]
  %s3 = inlined_call_operand.vmem [shape: f32[32,128], index: 3, kind: input, shape index: {}]
  %s4 = inlined_call_operand.vmem [shape: f32[128,16], index: 4, kind: input, shape index: {}]
  %s5 = inlined_call_operand.vmem [shape: f32[16,32], index: 5, kind: input, shape index: {}]
  %s6 = inlined_call_operand.vmem [shape: f32[32,64], index: 6, kind: input, shape index: {}]
  %s7 = inlined_call_operand.vmem [shape: f32[64,128], index: 7, kind: input, shape index: {}]
  %s8 = inlined_call_operand.vmem [shape: f32[32,128], index: 8, kind: output, shape index: {}]
  %s9 = sld [smem:[#allocation0]]
  $region50: #{decoder2d_forward.1} parent=0
    _
  %s11 = ssub.s32 1, %s9
  %s12 = scalar_select 0, %s11, %s9
  $region1: #{decoder2d_forward.1} parent=0
    #allocation2 [shape = 'u8[16384]{0}', space=vmem, size = 0x4000, scoped, tag = 'input window, operand 1, single buffered']
    #allocation3 [shape = 's32[1]{0}', space=sflag, size = 0x4, scoped, tag = 'scoped memory for decoder2d_forward.1']
    #allocation4 [shape = 'u8[4096]{0}', space=vmem, size = 0x1000, scoped, tag = 'input window, operand 2, single buffered']
    #allocation5 [shape = 's32[1]{0}', space=sflag, size = 0x4, scoped, tag = 'scoped memory for decoder2d_forward.1']
    %13 = vsyncpa [#allocation3], 0
    %14 = vsyncpa [#allocation5], 0
    // Predicated region
    $region2: #{decoder2d_forward.1} parent=1 // pred_check
      _
    $region3: #{decoder2d_forward.1} parent=1 // pred_check_branch
      %16 = sbr.rel (0) target = $region5
    $region4: #{decoder2d_forward.1} parent=1 // pred_region
      _
    $region5: #{decoder2d_forward.1} parent=1 // pred_fallthru
      _
    // Predicated region
    $region6: #{decoder2d_forward.1} parent=1 // pred_check
      _
    $region7: #{decoder2d_forward.1} parent=1 // pred_check_branch
      %18 = sbr.rel (0) target = $region9
    $region8: #{decoder2d_forward.1} parent=1 // pred_region
      %20 = vsyncadd [#allocation3], 0
      %s21 = sshll.u32 %s1, 4
      %s22 = int_to_ptr.hbm [resolvable:$true] %s21
      %s23 = sshll.u32 [#allocation2], 4
      %s24 = int_to_ptr.vmem [resolvable:$true] %s23
      %29 = dma.hbm_to_vmem [thread:$0]  %s22, 512, %s24, [#allocation3], 128, 128, 8
    $region9: #{decoder2d_forward.1} parent=1 // pred_fallthru
      _
    // Predicated region
    $region10: #{decoder2d_forward.1} parent=1 // pred_check
      _
    $region11: #{decoder2d_forward.1} parent=1 // pred_check_branch
      %31 = sbr.rel (0) target = $region13
    $region12: #{decoder2d_forward.1} parent=1 // pred_region
      %33 = vsyncadd [#allocation5], 0
      %s35 = sshll.u32 %s2, 4
      %s36 = int_to_ptr.hbm [resolvable:$true] %s35
      %s37 = sshll.u32 [#allocation4], 4
      %s38 = int_to_ptr.vmem [resolvable:$true] %s37
      %40 = dma.hbm_to_vmem [thread:$0]  %s36, 128, %s38, [#allocation5]
    $region13: #{decoder2d_forward.1} parent=1 // pred_fallthru
      _
    // Predicated region
    $region14: #{decoder2d_forward.1} parent=1 // pred_check
      _
    $region15: #{decoder2d_forward.1} parent=1 // pred_check_branch
      %42 = sbr.rel (0) target = $region17
    $region16: #{decoder2d_forward.1} parent=1 // pred_region
      _
    $region17: #{decoder2d_forward.1} parent=1 // pred_fallthru
      _
    // Predicated region
    $region18: #{decoder2d_forward.1} parent=1 // pred_check
      _
    $region19: #{decoder2d_forward.1} parent=1 // pred_check_branch
      %44 = sbr.rel (0) target = $region21
    $region20: #{decoder2d_forward.1} parent=1 // pred_region
      _
    $region21: #{decoder2d_forward.1} parent=1 // pred_fallthru
      _
    // Predicated region
    $region22: #{decoder2d_forward.1} parent=1 // pred_check
      _
    $region23: #{decoder2d_forward.1} parent=1 // pred_check_branch
      %46 = sbr.rel (0) target = $region25
    $region24: #{decoder2d_forward.1} parent=1 // pred_region
      _
    $region25: #{decoder2d_forward.1} parent=1 // pred_fallthru
      _
    // Predicated region
    $region26: #{decoder2d_forward.1} parent=1 // pred_check
      _
    $region27: #{decoder2d_forward.1} parent=1 // pred_check_branch
      %48 = sbr.rel (0) target = $region29
    $region28: #{decoder2d_forward.1} parent=1 // pred_region
      _
    $region29: #{decoder2d_forward.1} parent=1 // pred_fallthru
      _
    // Predicated region
    $region30: #{decoder2d_forward.1} parent=1 // pred_check
      _
    $region31: #{decoder2d_forward.1} parent=1 // pred_check_branch
      %50 = sbr.rel (0) target = $region33
    $region32: #{decoder2d_forward.1} parent=1 // pred_region
      _
    $region33: #{decoder2d_forward.1} parent=1 // pred_fallthru
      _
    // Predicated region
    $region34: #{decoder2d_forward.1} parent=1 // pred_check
      _
    $region35: #{decoder2d_forward.1} parent=1 // pred_check_branch
      %52 = sbr.rel (0) target = $region37
    $region36: #{decoder2d_forward.1} parent=1 // pred_region
      %54 = dma.done [#allocation3], 512
    $region37: #{decoder2d_forward.1} parent=1 // pred_fallthru
      _
    // Predicated region
    $region38: #{decoder2d_forward.1} parent=1 // pred_check
      _
    $region39: #{decoder2d_forward.1} parent=1 // pred_check_branch
      %56 = sbr.rel (0) target = $region41
    $region40: #{decoder2d_forward.1} parent=1 // pred_region
      %58 = dma.done [#allocation5], 128
    $region41: #{decoder2d_forward.1} parent=1 // pred_fallthru
      _
    %v59 = vld [vmem:[#allocation2] sm:$0xff]
    %v60 = vld [vmem:[#allocation2 + $0x8] sm:$0xff]
    %v61 = vld [vmem:[#allocation2 + $0x10] sm:$0xff]
    %v62 = vld [vmem:[#allocation2 + $0x18] sm:$0xff]
    %v63 = vld [vmem:[%s0] sm:$0x3]
    %vm64 = vcmask 15360
    %v66 = vsel %vm64, %v59, 0
    %v69 = vsel %vm64, %v60, 0
    %v72 = vsel %vm64, %v61, 0
    %v75 = vsel %vm64, %v62, 0
    %vm77 = vcmask 1041408
    %v79 = vsel %vm77, %v63, 0
    %81 = vmatpush.msra.mxu0 0.0
    %82 = vmatpush.msra.mxu0 0.0
    %83 = vmatpush.msra.mxu0 0.0
    %84 = vmatpush.msra.mxu0 0.0
    %85 = vmatpush.msra.mxu0 0.0
    %86 = vmatpush.msra.mxu0 0.0
    %87 = vmatpush.msra.mxu0 0.0
    %88 = vmatpush.msra.mxu0 0.0
    %89 = vmatpush.msra.mxu0 0.0
    %90 = vmatpush.msra.mxu0 0.0
    %91 = vmatpush.msra.mxu0 0.0
    %92 = vmatpush.msra.mxu0 0.0
    %93 = vmatpush.msra.mxu0 0.0
    %94 = vmatpush.msra.mxu0 0.0
    %95 = vmatpush.msra.mxu0 0.0
    %96 = vmatpush.msra.mxu0 %v79
    %97 = vmatmul.f32.gmra.mxu0 %v66
    %v98 = vpop.f32.mrf.mxu0
    %v99 = vadd.f32 0.0, %v98
    %100 = vmatmul.f32.gmra.mxu0 %v69
    %v101 = vpop.f32.mrf.mxu0
    %v102 = vadd.f32 0.0, %v101
    %103 = vmatmul.f32.gmra.mxu0 %v72
    %v104 = vpop.f32.mrf.mxu0
    %v105 = vadd.f32 0.0, %v104
    %106 = vmatmul.f32.gmra.mxu0 %v75
    %v107 = vpop.f32.mrf.mxu0
    %v108 = vadd.f32 0.0, %v107
    %109 = vdwg.mxu0
    %v110 = vld [vmem:[#allocation4] sm:$0xff]
    %vm111 = vcmask 64512
    %v113 = vsel %vm111, %v99, 0
    %v116 = vsel %vm111, %v102, 0
    %v119 = vsel %vm111, %v105, 0
    %v122 = vsel %vm111, %v108, 0
    %124 = vmatpush.msra.mxu0 0.0
    %125 = vmatpush.msra.mxu0 0.0
    %126 = vmatpush.msra.mxu0 0.0
    %127 = vmatpush.msra.mxu0 0.0
    %128 = vmatpush.msra.mxu0 0.0
    %129 = vmatpush.msra.mxu0 0.0
    %130 = vmatpush.msra.mxu0 0.0
    %131 = vmatpush.msra.mxu0 0.0
    %132 = vmatpush.msra.mxu0 0.0
    %133 = vmatpush.msra.mxu0 0.0
    %134 = vmatpush.msra.mxu0 0.0
    %135 = vmatpush.msra.mxu0 0.0
    %136 = vmatpush.msra.mxu0 0.0
    %137 = vmatpush.msra.mxu0 0.0
    %138 = vmatpush.msra.mxu0 0.0
    %139 = vmatpush.msra.mxu0 %v110
    %140 = vmatmul.f32.gmra.mxu0 %v113
    %v141 = vpop.f32.mrf.mxu0
    %v142 = vadd.f32 0.0, %v141
    %143 = vmatmul.f32.gmra.mxu0 %v116
    %v144 = vpop.f32.mrf.mxu0
    %v145 = vadd.f32 0.0, %v144
    %146 = vmatmul.f32.gmra.mxu0 %v119
    %v147 = vpop.f32.mrf.mxu0
    %v148 = vadd.f32 0.0, %v147
    %149 = vmatmul.f32.gmra.mxu0 %v122
    %v150 = vpop.f32.mrf.mxu0
    %v151 = vadd.f32 0.0, %v150
    %152 = vdwg.mxu0
    %v153 = vld [vmem:[%s3] sm:$0xff]
    %v154 = vld [vmem:[%s3 + $0x8] sm:$0xff]
    %v155 = vld [vmem:[%s3 + $0x10] sm:$0xff]
    %v156 = vld [vmem:[%s3 + $0x18] sm:$0xff]
    %v157 = vmul.f32 %v142, %v153
    %v158 = vmul.f32 %v145, %v154
    %v159 = vmul.f32 %v148, %v155
    %v160 = vmul.f32 %v151, %v156
    %v161 = vld [vmem:[%s4] sm:$0xff]
    %v162 = vld [vmem:[%s4 + $0x8] sm:$0xff]
    %v163 = vld [vmem:[%s4 + $0x10] sm:$0xff]
    %v164 = vld [vmem:[%s4 + $0x18] sm:$0xff]
    %v165 = vld [vmem:[%s4 + $0x20] sm:$0xff]
    %v166 = vld [vmem:[%s4 + $0x28] sm:$0xff]
    %v167 = vld [vmem:[%s4 + $0x30] sm:$0xff]
    %v168 = vld [vmem:[%s4 + $0x38] sm:$0xff]
    %v169 = vld [vmem:[%s4 + $0x40] sm:$0xff]
    %v170 = vld [vmem:[%s4 + $0x48] sm:$0xff]
    %v171 = vld [vmem:[%s4 + $0x50] sm:$0xff]
    %v172 = vld [vmem:[%s4 + $0x58] sm:$0xff]
    %v173 = vld [vmem:[%s4 + $0x60] sm:$0xff]
    %v174 = vld [vmem:[%s4 + $0x68] sm:$0xff]
    %v175 = vld [vmem:[%s4 + $0x70] sm:$0xff]
    %v176 = vld [vmem:[%s4 + $0x78] sm:$0xff]
    %177 = vmatpush.msra.mxu0 %v176
    %178 = vmatpush.msra.mxu0 %v175
    %179 = vmatpush.msra.mxu0 %v174
    %180 = vmatpush.msra.mxu0 %v173
    %181 = vmatpush.msra.mxu0 %v172
    %182 = vmatpush.msra.mxu0 %v171
    %183 = vmatpush.msra.mxu0 %v170
    %184 = vmatpush.msra.mxu0 %v169
    %185 = vmatpush.msra.mxu0 %v168
    %186 = vmatpush.msra.mxu0 %v167
    %187 = vmatpush.msra.mxu0 %v166
    %188 = vmatpush.msra.mxu0 %v165
    %189 = vmatpush.msra.mxu0 %v164
    %190 = vmatpush.msra.mxu0 %v163
    %191 = vmatpush.msra.mxu0 %v162
    %192 = vmatpush.msra.mxu0 %v161
    %193 = vmatmul.f32.gmra.mxu0 %v157
    %v194 = vpop.f32.mrf.mxu0
    %v195 = vadd.f32 0.0, %v194
    %196 = vmatmul.f32.gmra.mxu0 %v158
    %v197 = vpop.f32.mrf.mxu0
    %v198 = vadd.f32 0.0, %v197
    %199 = vmatmul.f32.gmra.mxu0 %v159
    %v200 = vpop.f32.mrf.mxu0
    %v201 = vadd.f32 0.0, %v200
    %202 = vmatmul.f32.gmra.mxu0 %v160
    %v203 = vpop.f32.mrf.mxu0
    %v204 = vadd.f32 0.0, %v203
    %205 = vdwg.mxu0
    %v206 = vtanh.pop %v195
    %v207 = vtanh.pop %v198
    %v208 = vtanh.pop %v201
    %v209 = vtanh.pop %v204
    %v210 = vld [vmem:[%s5] sm:$0xff]
    %v211 = vld [vmem:[%s5 + $0x8] sm:$0xff]
    %vm212 = vcmask 130048
    %v214 = vsel %vm212, %v206, 0
    %v217 = vsel %vm212, %v207, 0
    %v220 = vsel %vm212, %v208, 0
    %v223 = vsel %vm212, %v209, 0
    %225 = vmatpush.msra.mxu0 0.0
    %226 = vmatpush.msra.mxu0 0.0
    %227 = vmatpush.msra.mxu0 0.0
    %228 = vmatpush.msra.mxu0 0.0
    %229 = vmatpush.msra.mxu0 0.0
    %230 = vmatpush.msra.mxu0 0.0
    %231 = vmatpush.msra.mxu0 0.0
    %232 = vmatpush.msra.mxu0 0.0
    %233 = vmatpush.msra.mxu0 0.0
    %234 = vmatpush.msra.mxu0 0.0
    %235 = vmatpush.msra.mxu0 0.0
    %236 = vmatpush.msra.mxu0 0.0
    %237 = vmatpush.msra.mxu0 0.0
    %238 = vmatpush.msra.mxu0 0.0
    %239 = vmatpush.msra.mxu0 %v211
    %240 = vmatpush.msra.mxu0 %v210
    %241 = vmatmul.f32.gmra.mxu0 %v214
    %v242 = vpop.f32.mrf.mxu0
    %v243 = vadd.f32 0.0, %v242
    %244 = vmatmul.f32.gmra.mxu0 %v217
    %v245 = vpop.f32.mrf.mxu0
    %v246 = vadd.f32 0.0, %v245
    %247 = vmatmul.f32.gmra.mxu0 %v220
    %v248 = vpop.f32.mrf.mxu0
    %v249 = vadd.f32 0.0, %v248
    %250 = vmatmul.f32.gmra.mxu0 %v223
    %v251 = vpop.f32.mrf.mxu0
    %v252 = vadd.f32 0.0, %v251
    %253 = vdwg.mxu0
    %v254 = vtanh.pop %v243
    %v255 = vtanh.pop %v246
    %v256 = vtanh.pop %v249
    %v257 = vtanh.pop %v252
    %v258 = vld [vmem:[%s6] sm:$0xff]
    %v259 = vld [vmem:[%s6 + $0x8] sm:$0xff]
    %v260 = vld [vmem:[%s6 + $0x10] sm:$0xff]
    %v261 = vld [vmem:[%s6 + $0x18] sm:$0xff]
    %vm262 = vcmask 261120
    %v264 = vsel %vm262, %v254, 0
    %v267 = vsel %vm262, %v255, 0
    %v270 = vsel %vm262, %v256, 0
    %v273 = vsel %vm262, %v257, 0
    %275 = vmatpush.msra.mxu0 0.0
    %276 = vmatpush.msra.mxu0 0.0
    %277 = vmatpush.msra.mxu0 0.0
    %278 = vmatpush.msra.mxu0 0.0
    %279 = vmatpush.msra.mxu0 0.0
    %280 = vmatpush.msra.mxu0 0.0
    %281 = vmatpush.msra.mxu0 0.0
    %282 = vmatpush.msra.mxu0 0.0
    %283 = vmatpush.msra.mxu0 0.0
    %284 = vmatpush.msra.mxu0 0.0
    %285 = vmatpush.msra.mxu0 0.0
    %286 = vmatpush.msra.mxu0 0.0
    %287 = vmatpush.msra.mxu0 %v261
    %288 = vmatpush.msra.mxu0 %v260
    %289 = vmatpush.msra.mxu0 %v259
    %290 = vmatpush.msra.mxu0 %v258
    %291 = vmatmul.f32.gmra.mxu0 %v264
    %v292 = vpop.f32.mrf.mxu0
    %v293 = vadd.f32 0.0, %v292
    %294 = vmatmul.f32.gmra.mxu0 %v267
    %v295 = vpop.f32.mrf.mxu0
    %v296 = vadd.f32 0.0, %v295
    %297 = vmatmul.f32.gmra.mxu0 %v270
    %v298 = vpop.f32.mrf.mxu0
    %v299 = vadd.f32 0.0, %v298
    %300 = vmatmul.f32.gmra.mxu0 %v273
    %v301 = vpop.f32.mrf.mxu0
    %v302 = vadd.f32 0.0, %v301
    %303 = vdwg.mxu0
    %v304 = vtanh.pop %v293
    %v305 = vtanh.pop %v296
    %v306 = vtanh.pop %v299
    %v307 = vtanh.pop %v302
    %v308 = vld [vmem:[%s7] sm:$0xff]
    %v309 = vld [vmem:[%s7 + $0x8] sm:$0xff]
    %v310 = vld [vmem:[%s7 + $0x10] sm:$0xff]
    %v311 = vld [vmem:[%s7 + $0x18] sm:$0xff]
    %v312 = vld [vmem:[%s7 + $0x20] sm:$0xff]
    %v313 = vld [vmem:[%s7 + $0x28] sm:$0xff]
    %v314 = vld [vmem:[%s7 + $0x30] sm:$0xff]
    %v315 = vld [vmem:[%s7 + $0x38] sm:$0xff]
    %vm316 = vcmask 523264
    %v318 = vsel %vm316, %v304, 0
    %v321 = vsel %vm316, %v305, 0
    %v324 = vsel %vm316, %v306, 0
    %v327 = vsel %vm316, %v307, 0
    %329 = vmatpush.msra.mxu0 0.0
    %330 = vmatpush.msra.mxu0 0.0
    %331 = vmatpush.msra.mxu0 0.0
    %332 = vmatpush.msra.mxu0 0.0
    %333 = vmatpush.msra.mxu0 0.0
    %334 = vmatpush.msra.mxu0 0.0
    %335 = vmatpush.msra.mxu0 0.0
    %336 = vmatpush.msra.mxu0 0.0
    %337 = vmatpush.msra.mxu0 %v315
    %338 = vmatpush.msra.mxu0 %v314
    %339 = vmatpush.msra.mxu0 %v313
    %340 = vmatpush.msra.mxu0 %v312
    %341 = vmatpush.msra.mxu0 %v311
    %342 = vmatpush.msra.mxu0 %v310
    %343 = vmatpush.msra.mxu0 %v309
    %344 = vmatpush.msra.mxu0 %v308
    %345 = vmatmul.f32.gmra.mxu0 %v318
    %v346 = vpop.f32.mrf.mxu0
    %v347 = vadd.f32 0.0, %v346
    %348 = vmatmul.f32.gmra.mxu0 %v321
    %v349 = vpop.f32.mrf.mxu0
    %v350 = vadd.f32 0.0, %v349
    %351 = vmatmul.f32.gmra.mxu0 %v324
    %v352 = vpop.f32.mrf.mxu0
    %v353 = vadd.f32 0.0, %v352
    %354 = vmatmul.f32.gmra.mxu0 %v327
    %v355 = vpop.f32.mrf.mxu0
    %v356 = vadd.f32 0.0, %v355
    %357 = vdwg.mxu0
    %358 = vst [vmem:[%s8] sm:$0xff] %v347
    %359 = vst [vmem:[%s8 + $0x8] sm:$0xff] %v350
    %360 = vst [vmem:[%s8 + $0x10] sm:$0xff] %v353
    %361 = vst [vmem:[%s8 + $0x18] sm:$0xff] %v356
    // Predicated region
    $region42: #{decoder2d_forward.1} parent=1 // pred_check
      _
    $region43: #{decoder2d_forward.1} parent=1 // pred_check_branch
      %363 = sbr.rel (0) target = $region45
    $region44: #{decoder2d_forward.1} parent=1 // pred_region
      _
    $region45: #{decoder2d_forward.1} parent=1 // pred_fallthru
      _
    // Predicated region
    $region46: #{decoder2d_forward.1} parent=1 // pred_check
      _
    $region47: #{decoder2d_forward.1} parent=1 // pred_check_branch
      %365 = sbr.rel (0) target = $region49
    $region48: #{decoder2d_forward.1} parent=1 // pred_region
      _
    $region49: #{decoder2d_forward.1} parent=1 // pred_fallthru
      _
    %366 = vsyncpa [#allocation3], 1
    %367 = vsyncpa [#allocation5], 1

</llo_original>
